<compile_context>
chip_gen: v5e
topology: v5e:2x2
jax: 0.10.0
libtpu: 0.0.40
codegen_flags: <defaults>
</compile_context>

<pallas_src>
import functools

import jax
import jax.numpy as jnp
from jax.experimental import pallas as pl
from jax.experimental.pallas import tpu as pltpu

_SUBLANE = 16          # bf16 rows per packed vreg sublane group
_MIN_SPLIT_ROWS = 512  # force >=2 grid steps (v7x megacore) above this many rows


def _round_up(x, m):
    return (x + m - 1) // m * m


def _cdiv(a, b):
    return -(-a // b)


def _choose_tiling(batch, block_m):
    """Pick (tm, padded_batch): 16-aligned, minimal padding, >=2 tiles for big batches."""
    padded0 = _round_up(max(batch, _SUBLANE), _SUBLANE)
    n_tiles = _cdiv(padded0, block_m)
    if padded0 >= _MIN_SPLIT_ROWS:
        n_tiles = max(n_tiles, 2)          # let both v7x TCs share the work
    tm = _round_up(_cdiv(padded0, n_tiles), _SUBLANE)
    padded = _round_up(padded0, tm)        # extra pad < n_tiles * 16 rows
    return tm, padded


def _mlp_kernel(x_ref, w1_ref, b1_ref, w2_ref, b2_ref, w3_ref, b3_ref, o_ref):
    # Layer 1: Linear + ReLU  (bf16 operands on the MXU, f32 accumulation / VPU)
    h = jnp.dot(x_ref[...], w1_ref[...], preferred_element_type=jnp.float32)
    h = jnp.maximum(h + b1_ref[...], 0.0)
    # Layer 2: Linear + ReLU
    h = jnp.dot(h.astype(w2_ref.dtype), w2_ref[...],
                preferred_element_type=jnp.float32)
    h = jnp.maximum(h + b2_ref[...], 0.0)                       # (TM, H2) f32
    # Output layer (out_features == 1): VPU multiply + lane reduction
    # instead of an N=1 MXU matmul (which would waste 255/256 of the array).
    w3 = w3_ref[...]                                            # (1, H2) f32
    out = jnp.sum(h * w3, axis=-1, keepdims=True) + b3_ref[...]  # (TM, 1) f32
    o_ref[...] = out.astype(o_ref.dtype)                        # thin (TM, 1) store


@functools.partial(jax.jit, static_argnames=("block_m",))
def mlp_forward(x, w1, b1, w2, b2, w3, b3, *, block_m=8192):
    batch, d_in = x.shape
    h1 = w1.shape[1]
    h2 = w2.shape[1]

    # bf16 for MXU-native matmuls / halved bandwidth; biases + final-layer
    # weights (VPU path) stay f32.
    xb = x.astype(jnp.bfloat16)
    w1b = w1.astype(jnp.bfloat16)
    w2b = w2.astype(jnp.bfloat16)
    w3_row = w3.reshape(1, h2).astype(jnp.float32)
    b1f = b1.reshape(1, h1).astype(jnp.float32)
    b2f = b2.reshape(1, h2).astype(jnp.float32)
    b3f = b3.reshape(1, 1).astype(jnp.float32)

    tm, padded = _choose_tiling(batch, block_m)
    if padded != batch:
        xb = jnp.pad(xb, ((0, padded - batch), (0, 0)))
    grid = (padded // tm,)

    out_padded = pl.pallas_call(
        _mlp_kernel,
        out_shape=jax.ShapeDtypeStruct((padded, 1), jnp.float32),
        grid=grid,
        in_specs=[
            pl.BlockSpec((tm, d_in), lambda i: (i, 0)),   # x: tiled along batch
            pl.BlockSpec((d_in, h1), lambda i: (0, 0)),   # w1: weight-stationary
            pl.BlockSpec((1, h1), lambda i: (0, 0)),      # b1
            pl.BlockSpec((h1, h2), lambda i: (0, 0)),     # w2
            pl.BlockSpec((1, h2), lambda i: (0, 0)),      # b2
            pl.BlockSpec((1, h2), lambda i: (0, 0)),      # w3 (row vector)
            pl.BlockSpec((1, 1), lambda i: (0, 0)),       # b3
        ],
        out_specs=pl.BlockSpec((tm, 1), lambda i: (i, 0)),
        compiler_params=pltpu.CompilerParams(
            dimension_semantics=("parallel",),
        ),
    )(xb, w1b, b1f, w2b, b2f, w3_row, b3f)

    # Drop padding rows; output is already (batch, 1).
    return out_padded[:batch, :]


def init_linear_params(key, in_features, out_features, dtype=jnp.float32):
    """Deterministic PyTorch-style uniform init; weight stored as (in, out)."""
    kw, kb = jax.random.split(key)
    bound = 1.0 / jnp.sqrt(jnp.float32(in_features))
    w = jax.random.uniform(kw, (in_features, out_features), dtype, -bound, bound)
    b = jax.random.uniform(kb, (1, out_features), dtype, -bound, bound)
    return w, b


def reference_forward(x, w1, b1, w2, b2, w3, b3):
    h = jnp.maximum(x @ w1 + b1, 0.0)
    h = jnp.maximum(h @ w2 + b2, 0.0)
    return h @ w3 + b3


if __name__ == "__main__":
    # NeuralNetwork(input_size=32, hidden_layer_sizes=[64, 32], activation_fn=nn.ReLU)
    input_size = 32
    hidden_layer_sizes = (64, 32)
    batch = 8

    key = jax.random.PRNGKey(0)
    kx, k1, k2, k3 = jax.random.split(key, 4)

    x = jax.random.normal(kx, (batch, input_size), dtype=jnp.float32)
    w1, b1 = init_linear_params(k1, input_size, hidden_layer_sizes[0])
    w2, b2 = init_linear_params(k2, hidden_layer_sizes[0], hidden_layer_sizes[1])
    w3, b3 = init_linear_params(k3, hidden_layer_sizes[1], 1)

    out = mlp_forward(x, w1, b1, w2, b2, w3, b3)
    out = jax.block_until_ready(out)

    ref = reference_forward(x, w1, b1, w2, b2, w3, b3)
    assert out.shape == (batch, 1), out.shape
    # bf16 matmul operands with f32 accumulation -> loose tolerance vs f32 reference
    assert jnp.allclose(out, ref, atol=5e-2, rtol=5e-2), "mismatch vs reference"

    print("KERNEL_OK")
</pallas_src>

<mosaic_0001>
module attributes {stable_mosaic.version = 11 : i64} {
  func.func @_mlp_kernel(%arg0: i32, %arg1: memref<16x32xbf16, #tpu.memory_space<vmem>>, %arg2: memref<32x64xbf16, #tpu.memory_space<vmem>>, %arg3: memref<1x64xf32, #tpu.memory_space<vmem>>, %arg4: memref<64x32xbf16, #tpu.memory_space<vmem>>, %arg5: memref<1x32xf32, #tpu.memory_space<vmem>>, %arg6: memref<1x32xf32, #tpu.memory_space<vmem>>, %arg7: memref<1x1xf32, #tpu.memory_space<vmem>>, %arg8: memref<16x1xf32, #tpu.memory_space<vmem>>) attributes {dimension_semantics = [#tpu.dimension_semantics<parallel>], iteration_bounds = array<i64: 1>, scalar_prefetch = 0 : i64, scratch_operands = 0 : i64, tpu.core_type = #tpu.core_type<tc>, window_params = [{transform_indices = @transform_0, window_bounds = array<i64: 16, 32>}, {pipeline_mode = #tpu.pipeline_mode<synchronous>, transform_indices = @transform_1, window_bounds = array<i64: 32, 64>}, {pipeline_mode = #tpu.pipeline_mode<synchronous>, transform_indices = @transform_2, window_bounds = array<i64: 1, 64>}, {pipeline_mode = #tpu.pipeline_mode<synchronous>, transform_indices = @transform_3, window_bounds = array<i64: 64, 32>}, {pipeline_mode = #tpu.pipeline_mode<synchronous>, transform_indices = @transform_4, window_bounds = array<i64: 1, 32>}, {pipeline_mode = #tpu.pipeline_mode<synchronous>, transform_indices = @transform_5, window_bounds = array<i64: 1, 32>}, {pipeline_mode = #tpu.pipeline_mode<synchronous>, transform_indices = @transform_6, window_bounds = array<i64: 1, 1>}, {transform_indices = @transform_7, window_bounds = array<i64: 16, 1>}]} {
    %c0 = arith.constant 0 : index
    %c0_0 = arith.constant 0 : index
    %0 = vector.load %arg1[%c0, %c0_0] : memref<16x32xbf16, #tpu.memory_space<vmem>>, vector<16x32xbf16>
    %c0_1 = arith.constant 0 : index
    %c0_2 = arith.constant 0 : index
    %1 = vector.load %arg2[%c0_1, %c0_2] : memref<32x64xbf16, #tpu.memory_space<vmem>>, vector<32x64xbf16>
    %cst = arith.constant dense<0.000000e+00> : vector<16x64xf32>
    %2 = tpu.matmul %0, %1, %cst {dimension_numbers = #tpu.dot_dimension_numbers<[1], [0], [0], [1], [0, 0, 1, 1], [], []>} : vector<16x32xbf16>, vector<32x64xbf16>, vector<16x64xf32> -> vector<16x64xf32>
    %c0_3 = arith.constant 0 : index
    %c0_4 = arith.constant 0 : index
    %3 = vector.load %arg3[%c0_3, %c0_4] : memref<1x64xf32, #tpu.memory_space<vmem>>, vector<1x64xf32>
    %4 = vector.broadcast %3 : vector<1x64xf32> to vector<16x64xf32>
    %5 = arith.addf %2, %4 : vector<16x64xf32>
    %cst_5 = arith.constant 0.000000e+00 : f32
    %6 = vector.broadcast %cst_5 : f32 to vector<16x64xf32>
    %7 = arith.maximumf %5, %6 : vector<16x64xf32>
    %8 = arith.truncf %7 : vector<16x64xf32> to vector<16x64xbf16>
    %c0_6 = arith.constant 0 : index
    %c0_7 = arith.constant 0 : index
    %9 = vector.load %arg4[%c0_6, %c0_7] : memref<64x32xbf16, #tpu.memory_space<vmem>>, vector<64x32xbf16>
    %cst_8 = arith.constant dense<0.000000e+00> : vector<16x32xf32>
    %10 = tpu.matmul %8, %9, %cst_8 {dimension_numbers = #tpu.dot_dimension_numbers<[1], [0], [0], [1], [0, 0, 1, 1], [], []>} : vector<16x64xbf16>, vector<64x32xbf16>, vector<16x32xf32> -> vector<16x32xf32>
    %c0_9 = arith.constant 0 : index
    %c0_10 = arith.constant 0 : index
    %11 = vector.load %arg5[%c0_9, %c0_10] : memref<1x32xf32, #tpu.memory_space<vmem>>, vector<1x32xf32>
    %12 = vector.broadcast %11 : vector<1x32xf32> to vector<16x32xf32>
    %13 = arith.addf %10, %12 : vector<16x32xf32>
    %cst_11 = arith.constant 0.000000e+00 : f32
    %14 = vector.broadcast %cst_11 : f32 to vector<16x32xf32>
    %15 = arith.maximumf %13, %14 : vector<16x32xf32>
    %c0_12 = arith.constant 0 : index
    %c0_13 = arith.constant 0 : index
    %16 = vector.load %arg6[%c0_12, %c0_13] : memref<1x32xf32, #tpu.memory_space<vmem>>, vector<1x32xf32>
    %17 = vector.broadcast %16 : vector<1x32xf32> to vector<16x32xf32>
    %18 = arith.mulf %15, %17 : vector<16x32xf32>
    %cst_14 = arith.constant dense<0.000000e+00> : vector<16xf32>
    %19 = vector.multi_reduction <add>, %18, %cst_14 [1] : vector<16x32xf32> to vector<16xf32>
    %20 = vector.shape_cast %19 : vector<16xf32> to vector<16x1xf32>
    %c0_15 = arith.constant 0 : index
    %c0_16 = arith.constant 0 : index
    %21 = vector.load %arg7[%c0_15, %c0_16] : memref<1x1xf32, #tpu.memory_space<vmem>>, vector<1x1xf32>
    %22 = vector.broadcast %21 : vector<1x1xf32> to vector<16x1xf32>
    %23 = arith.addf %20, %22 : vector<16x1xf32>
    %c0_17 = arith.constant 0 : index
    %c0_18 = arith.constant 0 : index
    %24 = vector.load %arg8[%c0_17, %c0_18] : memref<16x1xf32, #tpu.memory_space<vmem>>, vector<16x1xf32>
    tpu.vector_store %arg8[%c0_17, %c0_18], %23 {strides = array<i32>} : memref<16x1xf32, #tpu.memory_space<vmem>>, vector<16x1xf32>,
    return
  }
  func.func @transform_0(%arg0: i32) -> (i32, i32) {
    %c0_i32 = arith.constant 0 : i32
    %c0_i32_0 = arith.constant 0 : i32
    return %arg0, %c0_i32 : i32, i32
  }
  func.func @transform_1(%arg0: i32) -> (i32, i32) {
    %c0_i32 = arith.constant 0 : i32
    %c0_i32_0 = arith.constant 0 : i32
    %c0_i32_1 = arith.constant 0 : i32
    return %c0_i32, %c0_i32_0 : i32, i32
  }
  func.func @transform_2(%arg0: i32) -> (i32, i32) {
    %c0_i32 = arith.constant 0 : i32
    %c0_i32_0 = arith.constant 0 : i32
    %c0_i32_1 = arith.constant 0 : i32
    return %c0_i32, %c0_i32_0 : i32, i32
  }
  func.func @transform_3(%arg0: i32) -> (i32, i32) {
    %c0_i32 = arith.constant 0 : i32
    %c0_i32_0 = arith.constant 0 : i32
    %c0_i32_1 = arith.constant 0 : i32
    return %c0_i32, %c0_i32_0 : i32, i32
  }
  func.func @transform_4(%arg0: i32) -> (i32, i32) {
    %c0_i32 = arith.constant 0 : i32
    %c0_i32_0 = arith.constant 0 : i32
    %c0_i32_1 = arith.constant 0 : i32
    return %c0_i32, %c0_i32_0 : i32, i32
  }
  func.func @transform_5(%arg0: i32) -> (i32, i32) {
    %c0_i32 = arith.constant 0 : i32
    %c0_i32_0 = arith.constant 0 : i32
    %c0_i32_1 = arith.constant 0 : i32
    return %c0_i32, %c0_i32_0 : i32, i32
  }
  func.func @transform_6(%arg0: i32) -> (i32, i32) {
    %c0_i32 = arith.constant 0 : i32
    %c0_i32_0 = arith.constant 0 : i32
    %c0_i32_1 = arith.constant 0 : i32
    return %c0_i32, %c0_i32_0 : i32, i32
  }
  func.func @transform_7(%arg0: i32) -> (i32, i32) {
    %c0_i32 = arith.constant 0 : i32
    %c0_i32_0 = arith.constant 0 : i32
    return %arg0, %c0_i32 : i32, i32
  }
}

</mosaic_0001>

<llo_original>
// kernel: mlp_forward.1
$region0: #{mlp_forward.1}
  #allocation0 [shape = 'u32[]', space=smem, size = 0x4, offset = 0x4, fixed_abs, tag = 'smem constant byte address 0x4 - core index']
  #allocation1 [shape = 'u32[72,128]{1,0:T(1,128)}', space=vmem, size = 0x9000, scoped, tag = 'internal scratch']
  #allocation2 [shape = 'f32[1,1]{1,0:T(1,128)S(1)}', space=vmem, size = 0x200, scoped, tag = 'scoped memory for mlp_forward.1']
  %s0 = inlined_call_operand.vmem [shape: bf16[16,32], index: 0, kind: input, shape index: {}]
  %s1 = inlined_call_operand.vmem [shape: bf16[32,64], index: 1, kind: input, shape index: {}]
  %s2 = inlined_call_operand.vmem [shape: f32[1,64], index: 2, kind: input, shape index: {}]
  %s3 = inlined_call_operand.vmem [shape: bf16[64,32], index: 3, kind: input, shape index: {}]
  %s4 = inlined_call_operand.vmem [shape: f32[1,32], index: 4, kind: input, shape index: {}]
  %s5 = inlined_call_operand.vmem [shape: f32[1,32], index: 5, kind: input, shape index: {}]
  %s6 = inlined_call_operand.<no memory space> [shape: f32[1,1], index: 6, kind: input, shape index: {}]
  %s7 = inlined_call_operand.vmem [shape: f32[16,1], index: 7, kind: output, shape index: {}]
  %s8 = sld [smem:[#allocation0]]
  $region38: #{mlp_forward.1} parent=0
    _
  %s10 = ssub.s32 1, %s8
  %s11 = scalar_select 0, %s10, %s8
  %v12 = vstv %s6
  %13 = vst [vmem:[#allocation2] sm:$0x1] %v12
  // Predicated region
  $region2: #{mlp_forward.1} parent=0 // pred_check
    _
  $region3: #{mlp_forward.1} parent=0 // pred_check_branch
    %15 = sbr.rel (0) target = $region5
  $region4: #{mlp_forward.1} parent=0 // pred_region
    _
  $region5: #{mlp_forward.1} parent=0 // pred_fallthru
    _
  // Predicated region
  $region6: #{mlp_forward.1} parent=0 // pred_check
    _
  $region7: #{mlp_forward.1} parent=0 // pred_check_branch
    %17 = sbr.rel (0) target = $region9
  $region8: #{mlp_forward.1} parent=0 // pred_region
    _
  $region9: #{mlp_forward.1} parent=0 // pred_fallthru
    _
  // Predicated region
  $region10: #{mlp_forward.1} parent=0 // pred_check
    _
  $region11: #{mlp_forward.1} parent=0 // pred_check_branch
    %19 = sbr.rel (0) target = $region13
  $region12: #{mlp_forward.1} parent=0 // pred_region
    _
  $region13: #{mlp_forward.1} parent=0 // pred_fallthru
    _
  // Predicated region
  $region14: #{mlp_forward.1} parent=0 // pred_check
    _
  $region15: #{mlp_forward.1} parent=0 // pred_check_branch
    %21 = sbr.rel (0) target = $region17
  $region16: #{mlp_forward.1} parent=0 // pred_region
    _
  $region17: #{mlp_forward.1} parent=0 // pred_fallthru
    _
  // Predicated region
  $region18: #{mlp_forward.1} parent=0 // pred_check
    _
  $region19: #{mlp_forward.1} parent=0 // pred_check_branch
    %23 = sbr.rel (0) target = $region21
  $region20: #{mlp_forward.1} parent=0 // pred_region
    _
  $region21: #{mlp_forward.1} parent=0 // pred_fallthru
    _
  // Predicated region
  $region22: #{mlp_forward.1} parent=0 // pred_check
    _
  $region23: #{mlp_forward.1} parent=0 // pred_check_branch
    %25 = sbr.rel (0) target = $region25
  $region24: #{mlp_forward.1} parent=0 // pred_region
    _
  $region25: #{mlp_forward.1} parent=0 // pred_fallthru
    _
  // Predicated region
  $region26: #{mlp_forward.1} parent=0 // pred_check
    _
  $region27: #{mlp_forward.1} parent=0 // pred_check_branch
    %27 = sbr.rel (0) target = $region29
  $region28: #{mlp_forward.1} parent=0 // pred_region
    _
  $region29: #{mlp_forward.1} parent=0 // pred_fallthru
    _
  %v29 = vld [vmem:[%s0] sm:$0xf]
  %v30 = vld [vmem:[%s0 + $0x4] sm:$0xf]
  %v31 = vld [vmem:[%s1] sm:$0xf]
  %v32 = vld [vmem:[%s1 + $0x4] sm:$0xf]
  %v33 = vld [vmem:[%s1 + $0x8] sm:$0xf]
  %v34 = vld [vmem:[%s1 + $0xc] sm:$0xf]
  %v35 = vld [vmem:[%s2] sm:$0x1]
  %v37 = vperm.slane %v35, 0
  %v41 = vunpack.c.l.b16 %v29
  %v42 = vunpack.c.l.b16 %v30
  %v43 = vpack.c.b16 %v42, %v41
  %v48 = vunpack.c.l.b16 %v31
  %v49 = vunpack.c.l.b16 %v32
  %v50 = vunpack.c.l.b16 %v33
  %v51 = vunpack.c.l.b16 %v34
  %v52 = vpack.c.b16 %v49, %v48
  %v53 = vpack.c.b16 %v51, %v50
  %vm56 = vcmask 261120
  %v58 = vsel %vm56, %v43, 0
  %60 = vmatpush.bf16.msra.mxu0 0
  %61 = vmatpush.bf16.msra.mxu0 0
  %62 = vmatpush.bf16.msra.mxu0 0
  %63 = vmatpush.bf16.msra.mxu0 0
  %64 = vmatpush.bf16.msra.mxu0 0
  %65 = vmatpush.bf16.msra.mxu0 0
  %66 = vmatpush.bf16.msra.mxu0 %v53
  %67 = vmatpush.bf16.msra.mxu0 %v52
  %68 = vmatmul.bf16.gmra.mxu0 %v58
  %v69 = vpop.f32.mrf.mxu0
  %v70 = vadd.f32 %v37, %v69
  %v71 = vpop.f32.mrf.mxu0
  %v72 = vadd.f32 %v37, %v71
  %73 = vdwg.mxu0
  %v74 = vmax.f32 %v70, 0.0
  %v75 = vmax.f32 %v72, 0.0
  %v76 = vpack.c.bf16 %v75, %v74
  %v77 = vld [vmem:[%s3] sm:$0xf]
  %v78 = vld [vmem:[%s3 + $0x4] sm:$0xf]
  %v79 = vld [vmem:[%s3 + $0x8] sm:$0xf]
  %v80 = vld [vmem:[%s3 + $0xc] sm:$0xf]
  %v81 = vld [vmem:[%s3 + $0x10] sm:$0xf]
  %v82 = vld [vmem:[%s3 + $0x14] sm:$0xf]
  %v83 = vld [vmem:[%s3 + $0x18] sm:$0xf]
  %v84 = vld [vmem:[%s3 + $0x1c] sm:$0xf]
  %v85 = vld [vmem:[%s4] sm:$0x1]
  %v87 = vperm.slane %v85, 0
  %v97 = vunpack.c.l.b16 %v77
  %v98 = vunpack.c.l.b16 %v78
  %v99 = vunpack.c.l.b16 %v79
  %v100 = vunpack.c.l.b16 %v80
  %v101 = vunpack.c.l.b16 %v81
  %v102 = vunpack.c.l.b16 %v82
  %v103 = vunpack.c.l.b16 %v83
  %v104 = vunpack.c.l.b16 %v84
  %v105 = vpack.c.b16 %v98, %v97
  %v106 = vpack.c.b16 %v100, %v99
  %v107 = vpack.c.b16 %v102, %v101
  %v108 = vpack.c.b16 %v104, %v103
  %vm113 = vcmask 523264
  %v115 = vsel %vm113, %v76, 0
  %117 = vmatpush.bf16.msra.mxu0 0
  %118 = vmatpush.bf16.msra.mxu0 0
  %119 = vmatpush.bf16.msra.mxu0 0
  %120 = vmatpush.bf16.msra.mxu0 0
  %121 = vmatpush.bf16.msra.mxu0 %v108
  %122 = vmatpush.bf16.msra.mxu0 %v107
  %123 = vmatpush.bf16.msra.mxu0 %v106
  %124 = vmatpush.bf16.msra.mxu0 %v105
  %125 = vmatmul.bf16.gmra.mxu0 %v115
  %v126 = vpop.f32.mrf.mxu0
  %v127 = vadd.f32 %v87, %v126
  %v128 = vpop.f32.mrf.mxu0
  %v129 = vadd.f32 %v87, %v128
  %130 = vdwg.mxu0
  %v131 = vmax.f32 %v127, 0.0
  %v132 = vmax.f32 %v129, 0.0
  %v133 = vld [vmem:[%s5] sm:$0x1]
  %v135 = vperm.slane %v133, 0
  %v137 = vmul.f32 %v131, %v135
  %v138 = vmul.f32 %v132, %v135
  %v139 = vsel %vm56, %v137, 0.0
  %140 = vadd.xlane.f32.xlu0 %v139
  %v141 = vpop.xlane.xlu0 %140
  %v142 = vsel %vm56, %v138, 0.0
  %143 = vadd.xlane.f32.xlu0 %v142
  %v144 = vpop.xlane.xlu0 %143
  %v145 = vld [vmem:[#allocation2] sm:$0x1]
  %v147 = vperm.slane %v145, 0
  %v149 = vadd.f32 %v141, %v147
  %v150 = vadd.f32 %v144, %v147
  %vm151 = vcmask 7168
  %152 = vst.msk [vmem:[%s7] sm:$0xff] %vm151, %v149
  %153 = vst.msk [vmem:[%s7 + $0x8] sm:$0xff] %vm151, %v150
  // Predicated region
  $region30: #{mlp_forward.1} parent=0 // pred_check
    _
  $region31: #{mlp_forward.1} parent=0 // pred_check_branch
    %155 = sbr.rel (0) target = $region33
  $region32: #{mlp_forward.1} parent=0 // pred_region
    _
  $region33: #{mlp_forward.1} parent=0 // pred_fallthru
    _
  // Predicated region
  $region34: #{mlp_forward.1} parent=0 // pred_check
    _
  $region35: #{mlp_forward.1} parent=0 // pred_check_branch
    %157 = sbr.rel (0) target = $region37
  $region36: #{mlp_forward.1} parent=0 // pred_region
    _
  $region37: #{mlp_forward.1} parent=0 // pred_fallthru
    _

</llo_original>
